<compile_context>
chip_gen: v5e
topology: v5e:2x2
jax: 0.10.0
libtpu: 0.0.40
codegen_flags: <defaults>
</compile_context>

<pallas_src>
import math

import jax
import jax.numpy as jnp
from jax.experimental import pallas as pl
from jax.experimental.pallas import tpu as pltpu


# --------------------------------------------------------------------------
# Pallas kernel
# --------------------------------------------------------------------------
def _posenc_kernel(x_ref, pe_ref, o_ref):
    # x_ref/o_ref: (Bb, ts, D); pe_ref: (ts, D).
    # pe cast happens in-kernel (rides the free VPU slot of a mem-bound add);
    # broadcast over the in-block batch chunk does real work when Bb > 1.
    o_ref[...] = x_ref[...] + pe_ref[...].astype(x_ref.dtype)[None, :, :]


# --------------------------------------------------------------------------
# Tile selection helpers (trace-time Python, cheap)
# --------------------------------------------------------------------------
def _largest_multiple_divisor(n, unit, cap):
    """Largest multiple of `unit` that divides n and is <= cap (None if none)."""
    best = None
    t = unit
    limit = min(n, cap)
    while t <= limit:
        if n % t == 0:
            best = t
        t += unit
    return best


def _largest_divisor(n, cap):
    """Largest divisor of n that is <= cap (always >= 1)."""
    best = 1
    for d in range(1, min(n, cap) + 1):
        if n % d == 0:
            best = d
    return best


_TARGET_BLOCK_BYTES = 4 * 1024 * 1024   # ~4 MiB per x/out block
_MAX_ROW_TILE = 1024                    # row-tile cap (sublane axis)
_MAX_BATCH_TILE = 8                     # batch-chunk cap inside a block


# --------------------------------------------------------------------------
# Wrapper
# --------------------------------------------------------------------------
def positional_encoding_add(x, pe):
    """out = x + pe[:S] (x: (B, S, D); pe: (max_len, D)). Dropout = identity."""
    B, S, D = x.shape
    max_len, d_pe = pe.shape
    assert d_pe == D, (d_pe, D)
    assert S <= max_len, f"sequence length {S} exceeds pe max_len {max_len}"

    itemsize = jnp.dtype(x.dtype).itemsize
    # Sub-32-bit dtypes pack along sublanes (bf16 vreg = 16x128, int8 = 32x128):
    # keep the row tile a multiple of the packed sublane count.
    unit = {1: 32, 2: 16}.get(itemsize, 8)

    row_bytes = D * itemsize
    row_cap = max(unit, min(_MAX_ROW_TILE, _TARGET_BLOCK_BYTES // max(row_bytes, 1)))
    ts = _largest_multiple_divisor(S, unit, row_cap)

    if ts is None:
        # S is not a multiple of the sublane-packing unit: fall back to slicing
        # pe to (S, D) so the full-extent (S, D) block stays legal.
        pe_in = pe[:S]
        ts = S
    else:
        # Full table goes in; rows are selected purely by the BlockSpec index
        # map (block index s on the (max_len, D) array; n_s*ts == S <= max_len).
        pe_in = pe

    bb_cap = max(1, min(_MAX_BATCH_TILE, _TARGET_BLOCK_BYTES // max(ts * row_bytes, 1)))
    bb = _largest_divisor(B, bb_cap)

    n_s = S // ts
    n_b = B // bb

    # Larger extent leads (both v7x TensorCores get work); batch innermost
    # otherwise so the pe block index is constant across it (pe DMA reuse).
    if n_s >= n_b:
        grid = (n_s, n_b)
        x_map = lambda s, b: (b, s, 0)
        pe_map = lambda s, b: (s, 0)
    else:
        grid = (n_b, n_s)
        x_map = lambda b, s: (b, s, 0)
        pe_map = lambda b, s: (s, 0)

    return pl.pallas_call(
        _posenc_kernel,
        out_shape=jax.ShapeDtypeStruct((B, S, D), x.dtype),
        grid=grid,
        in_specs=[
            pl.BlockSpec((bb, ts, D), x_map),   # contiguous full-D x blocks
            pl.BlockSpec((ts, D), pe_map),      # full-D pe rows, reused over Bb
        ],
        out_specs=pl.BlockSpec((bb, ts, D), x_map),  # lane-dense, unmasked stores
        compiler_params=pltpu.CompilerParams(
            dimension_semantics=("parallel", "parallel"),
            # 2 buffers x (x + pe + out) at ~4 MiB blocks ~= 24 MiB; raise the
            # scoped limit above v5e's 16 MiB default, still < v7x's 64 MiB.
            vmem_limit_bytes=48 * 1024 * 1024,
        ),
    )(x, pe_in)


# --------------------------------------------------------------------------
# Sinusoidal table (same formula as the PyTorch module's constructor)
# --------------------------------------------------------------------------
def make_sinusoidal_pe(max_len, d_model, dtype=jnp.float32):
    pos = jnp.arange(max_len, dtype=jnp.float32)[:, None]
    div = jnp.exp(
        jnp.arange(0, d_model, 2, dtype=jnp.float32)
        * (-math.log(10000.0) / d_model)
    )
    pe = jnp.zeros((max_len, d_model), jnp.float32)
    pe = pe.at[:, 0::2].set(jnp.sin(pos * div))
    pe = pe.at[:, 1::2].set(jnp.cos(pos * div))
    return pe.astype(dtype)


# TODO(synk): nn.Dropout(p=0.1) is treated as identity (eval/inference mode);
# training-mode stochastic dropout is not implemented in the kernel.
# Note: when x is bf16/fp16 the add happens in x.dtype (pe cast down), whereas
# torch's x + fp32-buffer promotes to fp32; acceptable for inference.


# --------------------------------------------------------------------------
if __name__ == "__main__":
    B, S, D = 2, 16, 128      # small shapes consistent with the module
    max_len = 64

    key = jax.random.PRNGKey(0)
    x = jax.random.normal(key, (B, S, D), jnp.float32)
    pe = make_sinusoidal_pe(max_len, D)

    fwd = jax.jit(positional_encoding_add)
    out = fwd(x, pe)
    jax.block_until_ready(out)

    ref = x + pe[None, :S, :]
    assert out.shape == (B, S, D), out.shape
    assert bool(jnp.all(jnp.isfinite(out)))
    assert bool(jnp.allclose(out, ref, atol=1e-6, rtol=1e-6))
    print("KERNEL_OK")
</pallas_src>

<mosaic_0001>
module attributes {stable_mosaic.version = 11 : i64} {
  func.func @_posenc_kernel(%arg0: i32, %arg1: i32, %arg2: memref<2x16x128xf32, #tpu.memory_space<vmem>>, %arg3: memref<16x128xf32, #tpu.memory_space<vmem>>, %arg4: memref<2x16x128xf32, #tpu.memory_space<vmem>>) attributes {dimension_semantics = [#tpu.dimension_semantics<parallel>, #tpu.dimension_semantics<parallel>], iteration_bounds = array<i64: 1, 1>, scalar_prefetch = 0 : i64, scratch_operands = 0 : i64, tpu.core_type = #tpu.core_type<tc>, window_params = [{transform_indices = @transform_0, window_bounds = array<i64: 2, 16, 128>}, {transform_indices = @transform_1, window_bounds = array<i64: 16, 128>}, {transform_indices = @transform_2, window_bounds = array<i64: 2, 16, 128>}]} {
    %c0 = arith.constant 0 : index
    %c0_0 = arith.constant 0 : index
    %c0_1 = arith.constant 0 : index
    %0 = vector.load %arg2[%c0, %c0_0, %c0_1] : memref<2x16x128xf32, #tpu.memory_space<vmem>>, vector<2x16x128xf32>
    %c0_2 = arith.constant 0 : index
    %c0_3 = arith.constant 0 : index
    %1 = vector.load %arg3[%c0_2, %c0_3] : memref<16x128xf32, #tpu.memory_space<vmem>>, vector<16x128xf32>
    %2 = vector.shape_cast %1 : vector<16x128xf32> to vector<1x16x128xf32>
    %3 = vector.broadcast %2 : vector<1x16x128xf32> to vector<2x16x128xf32>
    %4 = arith.addf %0, %3 : vector<2x16x128xf32>
    %c0_4 = arith.constant 0 : index
    %c0_5 = arith.constant 0 : index
    %c0_6 = arith.constant 0 : index
    %5 = vector.load %arg4[%c0_4, %c0_5, %c0_6] : memref<2x16x128xf32, #tpu.memory_space<vmem>>, vector<2x16x128xf32>
    tpu.vector_store %arg4[%c0_4, %c0_5, %c0_6], %4 {strides = array<i32>} : memref<2x16x128xf32, #tpu.memory_space<vmem>>, vector<2x16x128xf32>,
    return
  }
  func.func @transform_0(%arg0: i32, %arg1: i32) -> (i32, i32, i32) {
    %c0_i32 = arith.constant 0 : i32
    %c0_i32_0 = arith.constant 0 : i32
    return %arg1, %arg0, %c0_i32 : i32, i32, i32
  }
  func.func @transform_1(%arg0: i32, %arg1: i32) -> (i32, i32) {
    %c0_i32 = arith.constant 0 : i32
    %c0_i32_0 = arith.constant 0 : i32
    return %arg0, %c0_i32 : i32, i32
  }
  func.func @transform_2(%arg0: i32, %arg1: i32) -> (i32, i32, i32) {
    %c0_i32 = arith.constant 0 : i32
    %c0_i32_0 = arith.constant 0 : i32
    return %arg1, %arg0, %c0_i32 : i32, i32, i32
  }
}

</mosaic_0001>

<llo_original>
// kernel: positional_encoding_add.1
$region0: #{positional_encoding_add.1}
  #allocation0 [shape = 'u32[]', space=smem, size = 0x4, offset = 0x4, fixed_abs, tag = 'smem constant byte address 0x4 - core index']
  #allocation1 [shape = 'u32[72,128]{1,0:T(1,128)}', space=vmem, size = 0x9000, scoped, tag = 'internal scratch']
  %s0 = inlined_call_operand.hbm [shape: f32[2,16,128], index: 0, kind: input, shape index: {}]
  %s1 = inlined_call_operand.hbm [shape: f32[64,128], index: 1, kind: input, shape index: {}]
  %s2 = inlined_call_operand.hbm [shape: f32[2,16,128], index: 2, kind: output, shape index: {}]
  %s3 = sld [smem:[#allocation0]]
  $region26: #{positional_encoding_add.1} parent=0
    _
  %s5 = ssub.s32 1, %s3
  %s6 = scalar_select 0, %s5, %s3
  $region1: #{positional_encoding_add.1} parent=0
    #allocation2 [shape = 'u8[16384]{0}', space=vmem, size = 0x4000, scoped, tag = 'input window, operand 0, single buffered']
    #allocation3 [shape = 's32[1]{0}', space=sflag, size = 0x4, scoped, tag = 'scoped memory for positional_encoding_add.1']
    #allocation4 [shape = 's32[1]{0}', space=sflag, size = 0x4, scoped, tag = 'scoped memory for positional_encoding_add.1']
    #allocation5 [shape = 'u8[8192]{0}', space=vmem, size = 0x2000, scoped, tag = 'input window, operand 1, single buffered']
    #allocation6 [shape = 's32[1]{0}', space=sflag, size = 0x4, scoped, tag = 'scoped memory for positional_encoding_add.1']
    #allocation7 [shape = 'u8[16384]{0}', space=vmem, size = 0x4000, scoped, tag = 'output window, operand 0, single buffered']
    %7 = vsyncpa [#allocation3], 0
    %8 = vsyncpa [#allocation6], 0
    %9 = vsyncpa [#allocation4], 0
    // Predicated region
    $region2: #{positional_encoding_add.1} parent=1 // pred_check
      _
    $region3: #{positional_encoding_add.1} parent=1 // pred_check_branch
      %11 = sbr.rel (0) target = $region5
    $region4: #{positional_encoding_add.1} parent=1 // pred_region
      %13 = vsyncadd [#allocation3], 0
      %s14 = sshll.u32 %s0, 4
      %s15 = int_to_ptr.hbm [resolvable:$true] %s14
      %s16 = sshll.u32 [#allocation2], 4
      %s17 = int_to_ptr.vmem [resolvable:$true] %s16
      %22 = dma.hbm_to_vmem [thread:$0]  %s15, 512, %s17, [#allocation3], 128, 128, 8
    $region5: #{positional_encoding_add.1} parent=1 // pred_fallthru
      _
    // Predicated region
    $region6: #{positional_encoding_add.1} parent=1 // pred_check
      _
    $region7: #{positional_encoding_add.1} parent=1 // pred_check_branch
      %24 = sbr.rel (0) target = $region9
    $region8: #{positional_encoding_add.1} parent=1 // pred_region
      %26 = vsyncadd [#allocation6], 0
      %s27 = sshll.u32 %s1, 4
      %s28 = int_to_ptr.hbm [resolvable:$true] %s27
      %s29 = sshll.u32 [#allocation5], 4
      %s30 = int_to_ptr.vmem [resolvable:$true] %s29
      %35 = dma.hbm_to_vmem [thread:$0]  %s28, 256, %s30, [#allocation6], 128, 128, 8
    $region9: #{positional_encoding_add.1} parent=1 // pred_fallthru
      _
    // Predicated region
    $region10: #{positional_encoding_add.1} parent=1 // pred_check
      _
    $region11: #{positional_encoding_add.1} parent=1 // pred_check_branch
      %37 = sbr.rel (0) target = $region13
    $region12: #{positional_encoding_add.1} parent=1 // pred_region
      %39 = dma.done [#allocation3], 512
    $region13: #{positional_encoding_add.1} parent=1 // pred_fallthru
      _
    // Predicated region
    $region14: #{positional_encoding_add.1} parent=1 // pred_check
      _
    $region15: #{positional_encoding_add.1} parent=1 // pred_check_branch
      %41 = sbr.rel (0) target = $region17
    $region16: #{positional_encoding_add.1} parent=1 // pred_region
      %43 = dma.done [#allocation6], 256
    $region17: #{positional_encoding_add.1} parent=1 // pred_fallthru
      _
    %v44 = vld [vmem:[#allocation2] sm:$0xff]
    %v45 = vld [vmem:[#allocation2 + $0x8] sm:$0xff]
    %v46 = vld [vmem:[#allocation2 + $0x10] sm:$0xff]
    %v47 = vld [vmem:[#allocation2 + $0x18] sm:$0xff]
    %v48 = vld [vmem:[#allocation5] sm:$0xff]
    %v49 = vld [vmem:[#allocation5 + $0x8] sm:$0xff]
    %v50 = vadd.f32 %v44, %v48
    %v51 = vadd.f32 %v45, %v49
    %v52 = vadd.f32 %v46, %v48
    %v53 = vadd.f32 %v47, %v49
    %54 = vst [vmem:[#allocation7] sm:$0xff] %v50
    %55 = vst [vmem:[#allocation7 + $0x8] sm:$0xff] %v51
    %56 = vst [vmem:[#allocation7 + $0x10] sm:$0xff] %v52
    %57 = vst [vmem:[#allocation7 + $0x18] sm:$0xff] %v53
    // Predicated region
    $region18: #{positional_encoding_add.1} parent=1 // pred_check
      _
    $region19: #{positional_encoding_add.1} parent=1 // pred_check_branch
      %59 = sbr.rel (0) target = $region21
    $region20: #{positional_encoding_add.1} parent=1 // pred_region
      %61 = vsyncadd [#allocation4], 0
      %s62 = sshll.u32 [#allocation7], 4
      %s63 = int_to_ptr.vmem [resolvable:$true] %s62
      %s64 = sshll.u32 %s2, 4
      %s65 = int_to_ptr.hbm [resolvable:$true] %s64
      %70 = dma.vmem_to_hbm [thread:$0]  %s63, 512, %s65, [#allocation4], 128, 128, 8
    $region21: #{positional_encoding_add.1} parent=1 // pred_fallthru
      _
    // Predicated region
    $region22: #{positional_encoding_add.1} parent=1 // pred_check
      _
    $region23: #{positional_encoding_add.1} parent=1 // pred_check_branch
      %72 = sbr.rel (0) target = $region25
    $region24: #{positional_encoding_add.1} parent=1 // pred_region
      %74 = dma.done [#allocation4], 512
    $region25: #{positional_encoding_add.1} parent=1 // pred_fallthru
      _
    %75 = vsyncpa [#allocation3], 1
    %76 = vsyncpa [#allocation6], 1
    %77 = vsyncpa [#allocation4], 1

</llo_original>
